<compile_context>
chip_gen: v5e
topology: v5e:2x2
jax: 0.10.0
libtpu: 0.0.40
codegen_flags: <defaults>
</compile_context>

<pallas_src>
import jax
import jax.numpy as jnp
from jax import lax
from jax.experimental import pallas as pl
from jax.experimental.pallas import tpu as pltpu

# ----------------------------------------------------------------------------
# Config mirroring TemporalConvNet(num_inputs, num_channels, kernel_size)
# ----------------------------------------------------------------------------
NUM_INPUT = 4            # num_inputs
WINDOW = 16              # sequence length L
NUM_CHANNELS = [8, 8]    # num_channels
KERNEL_SIZE = 2          # kernel_size
BATCH = 2


# ----------------------------------------------------------------------------
# Fused Pallas kernel: all TemporalBlocks, whole batch, single invocation
# ----------------------------------------------------------------------------
def make_tcn_kernel(block_meta, L, k):
    """block_meta: tuple of (dilation, has_downsample) per TemporalBlock."""

    def kernel(x_ref, *refs):
        o_ref = refs[-1]
        wrefs = refs[:-1]

        blpad = x_ref.shape[-1]          # 128-lane padded packed batch*time axis
        # In-segment time index, hoisted ONCE and reused by every causal mask.
        t_idx = lax.broadcasted_iota(jnp.int32, (1, blpad), 1) % L

        h = x_ref[...].astype(jnp.float32)          # (Cin, B*L padded)

        def causal_tap(inp, s):
            # Delay by s along packed time: XLU lane roll + VPU mask.  Masking
            # (time index < s) -> 0 realises the causal zero-pad and blocks
            # cross-batch leakage across segment boundaries.
            if s == 0:
                return inp
            rolled = pltpu.roll(inp, shift=s, axis=1)
            return jnp.where(t_idx >= s, rolled, 0.0)

        ri = 0
        for dilation, has_ds in block_meta:
            w1 = [wrefs[ri + t][...] for t in range(k)]; ri += k   # k x (Cout, Cin)
            b1 = wrefs[ri][...]; ri += 1                           # (Cout, 1)
            w2 = [wrefs[ri + t][...] for t in range(k)]; ri += k   # k x (Cout, Cout)
            b2 = wrefs[ri][...]; ri += 1                           # (Cout, 1)
            if has_ds:
                wd = wrefs[ri][...]                                # (Cout, Cin)
                bd = wrefs[ri + 1][...]                            # (Cout, 1)
                ri += 2

            def causal_conv(inp, w_taps, b, _d=dilation):
                # k accumulating MXU matmuls (no sublane im2col concat).
                acc = b                      # (Cout,1); broadcasts on first add
                for t in range(k):
                    s = (k - 1 - t) * _d
                    acc = acc + jnp.dot(w_taps[t], causal_tap(inp, s),
                                        preferred_element_type=jnp.float32)
                return jnp.maximum(acc, 0.0)  # conv -> bias -> ReLU (dropout = id)

            h1 = causal_conv(h, w1, b1)
            h2 = causal_conv(h1, w2, b2)
            if has_ds:
                res = jnp.dot(wd, h, preferred_element_type=jnp.float32) + bd
            else:
                res = h
            h = jnp.maximum(h2 + res, 0.0)            # block-level ReLU

        o_ref[...] = h.astype(o_ref.dtype)            # lane-dense (Cout,128) store

    return kernel


# ----------------------------------------------------------------------------
# Wrapper: one fused, grid-free pallas_call for the whole TemporalConvNet
# ----------------------------------------------------------------------------
def tcn_forward(x, params):
    """TemporalConvNet.forward: x (B, C_in, L) NCL -> (B, C_last, L) NCL."""
    B, Cin, L = x.shape
    k = KERNEL_SIZE
    BL = B * L
    BLpad = ((BL + 127) // 128) * 128     # native lane width

    # Layout plumbing (wrapper side): pack batch along the lane/time axis so
    # the whole batch is a single matmul RHS per tap; pad to 128 lanes so all
    # vector ops, rolls and the output store are lane-dense / tile-aligned.
    xp = jnp.transpose(x, (1, 0, 2)).reshape(Cin, BL)
    xp = jnp.pad(xp, ((0, 0), (0, BLpad - BL)))

    block_meta = []
    weight_args = []
    for blk in params['blocks']:
        has_ds = 'wd' in blk
        block_meta.append((blk['dilation'], has_ds))
        weight_args += [*blk['w1_taps'], blk['b1'], *blk['w2_taps'], blk['b2']]
        if has_ds:                        # no dummy operands when no downsample
            weight_args += [blk['wd'], blk['bd']]

    Cout = params['blocks'][-1]['b2'].shape[0]
    kernel = make_tcn_kernel(tuple(block_meta), L, k)

    out = pl.pallas_call(
        kernel,
        out_shape=jax.ShapeDtypeStruct((Cout, BLpad), jnp.float32),
        # No grid: single step, whole (tiny) arrays resident in VMEM.
    )(xp, *weight_args)

    # Unpack back to PyTorch's NCL layout (wrapper-side reshape/transpose).
    return jnp.transpose(out[:, :BL].reshape(Cout, B, L), (1, 0, 2))


# ----------------------------------------------------------------------------
# Deterministic parameter construction (synthetic weights, weight_norm folded)
# ----------------------------------------------------------------------------
def _weight_norm(v, g):
    norm = jnp.sqrt(jnp.sum(v * v, axis=tuple(range(1, v.ndim)), keepdims=True))
    return g * v / norm


def init_params(key):
    # NOTE: the original module applies a `weights_init` fn not included in the
    # spec; it only affects parameter values, so synthetic weights are used.
    keys = jax.random.split(key, 32)
    ki = iter(keys)
    blocks = []
    in_ch = NUM_INPUT
    for i, out_ch in enumerate(NUM_CHANNELS):
        d = 2 ** i
        # conv1: PyTorch Conv2d weight (Cout, Cin, 1, k), weight_norm'd.
        v1 = jax.random.normal(next(ki), (out_ch, in_ch, 1, KERNEL_SIZE), jnp.float32) * 0.1
        g1 = 0.5 + jax.random.uniform(next(ki), (out_ch, 1, 1, 1), jnp.float32)
        w1_t = _weight_norm(v1, g1)[:, :, 0, :]                 # (Cout, Cin, k)
        b1 = jax.random.normal(next(ki), (out_ch,), jnp.float32) * 0.1
        # conv2
        v2 = jax.random.normal(next(ki), (out_ch, out_ch, 1, KERNEL_SIZE), jnp.float32) * 0.1
        g2 = 0.5 + jax.random.uniform(next(ki), (out_ch, 1, 1, 1), jnp.float32)
        w2_t = _weight_norm(v2, g2)[:, :, 0, :]                 # (Cout, Cout, k)
        b2 = jax.random.normal(next(ki), (out_ch,), jnp.float32) * 0.1

        blk = {
            'dilation': d,
            # reference (PyTorch) layouts
            'w1_t': w1_t, 'b1_t': b1, 'w2_t': w2_t, 'b2_t': b2,
            # kernel layouts: per-tap (Cout, Cin) weights + (Cout, 1) biases
            'w1_taps': tuple(w1_t[:, :, t] for t in range(KERNEL_SIZE)),
            'b1': b1[:, None],
            'w2_taps': tuple(w2_t[:, :, t] for t in range(KERNEL_SIZE)),
            'b2': b2[:, None],
        }
        if in_ch != out_ch:  # Conv1d(in, out, 1) downsample
            wd_t = jax.random.normal(next(ki), (out_ch, in_ch), jnp.float32) * 0.1
            bd_t = jax.random.normal(next(ki), (out_ch,), jnp.float32) * 0.1
            blk.update({'wd_t': wd_t, 'bd_t': bd_t,
                        'wd': wd_t, 'bd': bd_t[:, None]})
        blocks.append(blk)
        in_ch = out_ch
    return {'blocks': blocks}


# ----------------------------------------------------------------------------
# Pure-JAX reference (for correctness check of the Pallas kernel)
# ----------------------------------------------------------------------------
def ref_forward(x, params):
    h = x  # (B, C, L)
    for blk in params['blocks']:
        d = blk['dilation']
        p = (KERNEL_SIZE - 1) * d

        def conv(inp, w, b, _d=d, _p=p):
            inp_p = jnp.pad(inp, ((0, 0), (0, 0), (_p, 0)))
            y = lax.conv_general_dilated(inp_p, w, window_strides=(1,),
                                         padding='VALID', rhs_dilation=(_d,),
                                         dimension_numbers=('NCH', 'OIH', 'NCH'))
            return jax.nn.relu(y + b[None, :, None])

        h1 = conv(h, blk['w1_t'], blk['b1_t'])
        h2 = conv(h1, blk['w2_t'], blk['b2_t'])
        if 'wd_t' in blk:
            res = jnp.einsum('bcl,oc->bol', h, blk['wd_t']) + blk['bd_t'][None, :, None]
        else:
            res = h
        h = jax.nn.relu(h2 + res)
    return h


# ----------------------------------------------------------------------------
if __name__ == "__main__":
    key = jax.random.PRNGKey(0)
    k_param, k_x = jax.random.split(key)
    params = init_params(k_param)
    x = jax.random.normal(k_x, (BATCH, NUM_INPUT, WINDOW), jnp.float32)

    fwd = jax.jit(lambda xx: tcn_forward(xx, params))
    out = jax.block_until_ready(fwd(x))

    ref = ref_forward(x, params)
    assert out.shape == (BATCH, NUM_CHANNELS[-1], WINDOW)
    assert jnp.allclose(out, ref, atol=1e-4, rtol=1e-4), \
        f"max abs err = {jnp.max(jnp.abs(out - ref))}"

    print("KERNEL_OK")
</pallas_src>

<mosaic_0001>
module attributes {stable_mosaic.version = 11 : i64} {
  func.func @kernel(%arg0: memref<4x128xf32, #tpu.memory_space<vmem>>, %arg1: memref<8x4xf32, #tpu.memory_space<vmem>>, %arg2: memref<8x4xf32, #tpu.memory_space<vmem>>, %arg3: memref<8x1xf32, #tpu.memory_space<vmem>>, %arg4: memref<8x8xf32, #tpu.memory_space<vmem>>, %arg5: memref<8x8xf32, #tpu.memory_space<vmem>>, %arg6: memref<8x1xf32, #tpu.memory_space<vmem>>, %arg7: memref<8x4xf32, #tpu.memory_space<vmem>>, %arg8: memref<8x1xf32, #tpu.memory_space<vmem>>, %arg9: memref<8x8xf32, #tpu.memory_space<vmem>>, %arg10: memref<8x8xf32, #tpu.memory_space<vmem>>, %arg11: memref<8x1xf32, #tpu.memory_space<vmem>>, %arg12: memref<8x8xf32, #tpu.memory_space<vmem>>, %arg13: memref<8x8xf32, #tpu.memory_space<vmem>>, %arg14: memref<8x1xf32, #tpu.memory_space<vmem>>, %arg15: memref<8x128xf32, #tpu.memory_space<vmem>>) attributes {dimension_semantics = [], scalar_prefetch = 0 : i64, scratch_operands = 0 : i64, tpu.core_type = #tpu.core_type<tc>} {
    %0 = tpu.iota {dimensions = array<i32: 1>} : vector<1x128xi32>
    %c16_i32 = arith.constant 16 : i32
    %c0_i32 = arith.constant 0 : i32
    %1 = arith.cmpi eq, %c16_i32, %c0_i32 : i32
    %c1_i32 = arith.constant 1 : i32
    %2 = arith.select %1, %c1_i32, %c16_i32 : i32
    %3 = vector.broadcast %2 : i32 to vector<1x128xi32>
    %4 = arith.remsi %0, %3 : vector<1x128xi32>
    %c0_i32_0 = arith.constant 0 : i32
    %5 = vector.broadcast %c0_i32_0 : i32 to vector<1x128xi32>
    %6 = arith.cmpi ne, %4, %5 : vector<1x128xi32>
    %c0_i32_1 = arith.constant 0 : i32
    %7 = vector.broadcast %c0_i32_1 : i32 to vector<1x128xi32>
    %8 = arith.cmpi slt, %4, %7 : vector<1x128xi32>
    %c0_i32_2 = arith.constant 0 : i32
    %9 = arith.cmpi slt, %2, %c0_i32_2 : i32
    %10 = vector.broadcast %9 : i1 to vector<1x128xi1>
    %11 = vector.broadcast %10 : vector<1x128xi1> to vector<1x128xi1>
    %12 = arith.xori %8, %11 : vector<1x128xi1>
    %13 = arith.andi %12, %6 : vector<1x128xi1>
    %14 = vector.broadcast %2 : i32 to vector<1x128xi32>
    %15 = arith.addi %4, %14 : vector<1x128xi32>
    %16 = arith.select %13, %15, %4 : vector<1x128xi1>, vector<1x128xi32>
    %c0 = arith.constant 0 : index
    %c0_3 = arith.constant 0 : index
    %17 = vector.load %arg0[%c0, %c0_3] : memref<4x128xf32, #tpu.memory_space<vmem>>, vector<4x128xf32>
    %c0_4 = arith.constant 0 : index
    %c0_5 = arith.constant 0 : index
    %18 = vector.load %arg1[%c0_4, %c0_5] : memref<8x4xf32, #tpu.memory_space<vmem>>, vector<8x4xf32>
    %c0_6 = arith.constant 0 : index
    %c0_7 = arith.constant 0 : index
    %19 = vector.load %arg2[%c0_6, %c0_7] : memref<8x4xf32, #tpu.memory_space<vmem>>, vector<8x4xf32>
    %c0_8 = arith.constant 0 : index
    %c0_9 = arith.constant 0 : index
    %20 = vector.load %arg3[%c0_8, %c0_9] : memref<8x1xf32, #tpu.memory_space<vmem>>, vector<8x1xf32>
    %c0_10 = arith.constant 0 : index
    %c0_11 = arith.constant 0 : index
    %21 = vector.load %arg4[%c0_10, %c0_11] : memref<8x8xf32, #tpu.memory_space<vmem>>, vector<8x8xf32>
    %c0_12 = arith.constant 0 : index
    %c0_13 = arith.constant 0 : index
    %22 = vector.load %arg5[%c0_12, %c0_13] : memref<8x8xf32, #tpu.memory_space<vmem>>, vector<8x8xf32>
    %c0_14 = arith.constant 0 : index
    %c0_15 = arith.constant 0 : index
    %23 = vector.load %arg6[%c0_14, %c0_15] : memref<8x1xf32, #tpu.memory_space<vmem>>, vector<8x1xf32>
    %c0_16 = arith.constant 0 : index
    %c0_17 = arith.constant 0 : index
    %24 = vector.load %arg7[%c0_16, %c0_17] : memref<8x4xf32, #tpu.memory_space<vmem>>, vector<8x4xf32>
    %c0_18 = arith.constant 0 : index
    %c0_19 = arith.constant 0 : index
    %25 = vector.load %arg8[%c0_18, %c0_19] : memref<8x1xf32, #tpu.memory_space<vmem>>, vector<8x1xf32>
    %c1_i32_20 = arith.constant 1 : i32
    %26 = tpu.dynamic_rotate %17 by %c1_i32_20 dim 1 : vector<4x128xf32>, i32 -> vector<4x128xf32>
    %c1_i32_21 = arith.constant 1 : i32
    %27 = vector.broadcast %c1_i32_21 : i32 to vector<1x128xi32>
    %28 = arith.cmpi sge, %16, %27 : vector<1x128xi32>
    %cst = arith.constant 0.000000e+00 : f32
    %29 = vector.shape_cast %28 : vector<1x128xi1> to vector<1x128xi1>
    %30 = vector.broadcast %29 : vector<1x128xi1> to vector<4x128xi1>
    %31 = vector.broadcast %cst : f32 to vector<4x128xf32>
    %32 = arith.select %30, %26, %31 : vector<4x128xi1>, vector<4x128xf32>
    %cst_22 = arith.constant dense<0.000000e+00> : vector<8x128xf32>
    %33 = tpu.matmul %18, %32, %cst_22 {dimension_numbers = #tpu.dot_dimension_numbers<[1], [0], [0], [1], [0, 0, 1, 1], [], []>} : vector<8x4xf32>, vector<4x128xf32>, vector<8x128xf32> -> vector<8x128xf32>
    %34 = vector.broadcast %20 : vector<8x1xf32> to vector<8x128xf32>
    %35 = arith.addf %34, %33 : vector<8x128xf32>
    %cst_23 = arith.constant dense<0.000000e+00> : vector<8x128xf32>
    %36 = tpu.matmul %19, %17, %cst_23 {dimension_numbers = #tpu.dot_dimension_numbers<[1], [0], [0], [1], [0, 0, 1, 1], [], []>} : vector<8x4xf32>, vector<4x128xf32>, vector<8x128xf32> -> vector<8x128xf32>
    %37 = arith.addf %35, %36 : vector<8x128xf32>
    %cst_24 = arith.constant 0.000000e+00 : f32
    %38 = vector.broadcast %cst_24 : f32 to vector<8x128xf32>
    %39 = arith.maximumf %37, %38 : vector<8x128xf32>
    %c1_i32_25 = arith.constant 1 : i32
    %40 = tpu.dynamic_rotate %39 by %c1_i32_25 dim 1 : vector<8x128xf32>, i32 -> vector<8x128xf32>
    %c1_i32_26 = arith.constant 1 : i32
    %41 = vector.broadcast %c1_i32_26 : i32 to vector<1x128xi32>
    %42 = arith.cmpi sge, %16, %41 : vector<1x128xi32>
    %cst_27 = arith.constant 0.000000e+00 : f32
    %43 = vector.shape_cast %42 : vector<1x128xi1> to vector<1x128xi1>
    %44 = vector.broadcast %43 : vector<1x128xi1> to vector<8x128xi1>
    %45 = vector.broadcast %cst_27 : f32 to vector<8x128xf32>
    %46 = arith.select %44, %40, %45 : vector<8x128xi1>, vector<8x128xf32>
    %cst_28 = arith.constant dense<0.000000e+00> : vector<8x128xf32>
    %47 = tpu.matmul %21, %46, %cst_28 {dimension_numbers = #tpu.dot_dimension_numbers<[1], [0], [0], [1], [0, 0, 1, 1], [], []>} : vector<8x8xf32>, vector<8x128xf32>, vector<8x128xf32> -> vector<8x128xf32>
    %48 = vector.broadcast %23 : vector<8x1xf32> to vector<8x128xf32>
    %49 = arith.addf %48, %47 : vector<8x128xf32>
    %cst_29 = arith.constant dense<0.000000e+00> : vector<8x128xf32>
    %50 = tpu.matmul %22, %39, %cst_29 {dimension_numbers = #tpu.dot_dimension_numbers<[1], [0], [0], [1], [0, 0, 1, 1], [], []>} : vector<8x8xf32>, vector<8x128xf32>, vector<8x128xf32> -> vector<8x128xf32>
    %51 = arith.addf %49, %50 : vector<8x128xf32>
    %cst_30 = arith.constant 0.000000e+00 : f32
    %52 = vector.broadcast %cst_30 : f32 to vector<8x128xf32>
    %53 = arith.maximumf %51, %52 : vector<8x128xf32>
    %cst_31 = arith.constant dense<0.000000e+00> : vector<8x128xf32>
    %54 = tpu.matmul %24, %17, %cst_31 {dimension_numbers = #tpu.dot_dimension_numbers<[1], [0], [0], [1], [0, 0, 1, 1], [], []>} : vector<8x4xf32>, vector<4x128xf32>, vector<8x128xf32> -> vector<8x128xf32>
    %55 = vector.broadcast %25 : vector<8x1xf32> to vector<8x128xf32>
    %56 = arith.addf %54, %55 : vector<8x128xf32>
    %57 = arith.addf %53, %56 : vector<8x128xf32>
    %cst_32 = arith.constant 0.000000e+00 : f32
    %58 = vector.broadcast %cst_32 : f32 to vector<8x128xf32>
    %59 = arith.maximumf %57, %58 : vector<8x128xf32>
    %c0_33 = arith.constant 0 : index
    %c0_34 = arith.constant 0 : index
    %60 = vector.load %arg9[%c0_33, %c0_34] : memref<8x8xf32, #tpu.memory_space<vmem>>, vector<8x8xf32>
    %c0_35 = arith.constant 0 : index
    %c0_36 = arith.constant 0 : index
    %61 = vector.load %arg10[%c0_35, %c0_36] : memref<8x8xf32, #tpu.memory_space<vmem>>, vector<8x8xf32>
    %c0_37 = arith.constant 0 : index
    %c0_38 = arith.constant 0 : index
    %62 = vector.load %arg11[%c0_37, %c0_38] : memref<8x1xf32, #tpu.memory_space<vmem>>, vector<8x1xf32>
    %c0_39 = arith.constant 0 : index
    %c0_40 = arith.constant 0 : index
    %63 = vector.load %arg12[%c0_39, %c0_40] : memref<8x8xf32, #tpu.memory_space<vmem>>, vector<8x8xf32>
    %c0_41 = arith.constant 0 : index
    %c0_42 = arith.constant 0 : index
    %64 = vector.load %arg13[%c0_41, %c0_42] : memref<8x8xf32, #tpu.memory_space<vmem>>, vector<8x8xf32>
    %c0_43 = arith.constant 0 : index
    %c0_44 = arith.constant 0 : index
    %65 = vector.load %arg14[%c0_43, %c0_44] : memref<8x1xf32, #tpu.memory_space<vmem>>, vector<8x1xf32>
    %c2_i32 = arith.constant 2 : i32
    %66 = tpu.dynamic_rotate %59 by %c2_i32 dim 1 : vector<8x128xf32>, i32 -> vector<8x128xf32>
    %c2_i32_45 = arith.constant 2 : i32
    %67 = vector.broadcast %c2_i32_45 : i32 to vector<1x128xi32>
    %68 = arith.cmpi sge, %16, %67 : vector<1x128xi32>
    %cst_46 = arith.constant 0.000000e+00 : f32
    %69 = vector.shape_cast %68 : vector<1x128xi1> to vector<1x128xi1>
    %70 = vector.broadcast %69 : vector<1x128xi1> to vector<8x128xi1>
    %71 = vector.broadcast %cst_46 : f32 to vector<8x128xf32>
    %72 = arith.select %70, %66, %71 : vector<8x128xi1>, vector<8x128xf32>
    %cst_47 = arith.constant dense<0.000000e+00> : vector<8x128xf32>
    %73 = tpu.matmul %60, %72, %cst_47 {dimension_numbers = #tpu.dot_dimension_numbers<[1], [0], [0], [1], [0, 0, 1, 1], [], []>} : vector<8x8xf32>, vector<8x128xf32>, vector<8x128xf32> -> vector<8x128xf32>
    %74 = vector.broadcast %62 : vector<8x1xf32> to vector<8x128xf32>
    %75 = arith.addf %74, %73 : vector<8x128xf32>
    %cst_48 = arith.constant dense<0.000000e+00> : vector<8x128xf32>
    %76 = tpu.matmul %61, %59, %cst_48 {dimension_numbers = #tpu.dot_dimension_numbers<[1], [0], [0], [1], [0, 0, 1, 1], [], []>} : vector<8x8xf32>, vector<8x128xf32>, vector<8x128xf32> -> vector<8x128xf32>
    %77 = arith.addf %75, %76 : vector<8x128xf32>
    %cst_49 = arith.constant 0.000000e+00 : f32
    %78 = vector.broadcast %cst_49 : f32 to vector<8x128xf32>
    %79 = arith.maximumf %77, %78 : vector<8x128xf32>
    %c2_i32_50 = arith.constant 2 : i32
    %80 = tpu.dynamic_rotate %79 by %c2_i32_50 dim 1 : vector<8x128xf32>, i32 -> vector<8x128xf32>
    %c2_i32_51 = arith.constant 2 : i32
    %81 = vector.broadcast %c2_i32_51 : i32 to vector<1x128xi32>
    %82 = arith.cmpi sge, %16, %81 : vector<1x128xi32>
    %cst_52 = arith.constant 0.000000e+00 : f32
    %83 = vector.shape_cast %82 : vector<1x128xi1> to vector<1x128xi1>
    %84 = vector.broadcast %83 : vector<1x128xi1> to vector<8x128xi1>
    %85 = vector.broadcast %cst_52 : f32 to vector<8x128xf32>
    %86 = arith.select %84, %80, %85 : vector<8x128xi1>, vector<8x128xf32>
    %cst_53 = arith.constant dense<0.000000e+00> : vector<8x128xf32>
    %87 = tpu.matmul %63, %86, %cst_53 {dimension_numbers = #tpu.dot_dimension_numbers<[1], [0], [0], [1], [0, 0, 1, 1], [], []>} : vector<8x8xf32>, vector<8x128xf32>, vector<8x128xf32> -> vector<8x128xf32>
    %88 = vector.broadcast %65 : vector<8x1xf32> to vector<8x128xf32>
    %89 = arith.addf %88, %87 : vector<8x128xf32>
    %cst_54 = arith.constant dense<0.000000e+00> : vector<8x128xf32>
    %90 = tpu.matmul %64, %79, %cst_54 {dimension_numbers = #tpu.dot_dimension_numbers<[1], [0], [0], [1], [0, 0, 1, 1], [], []>} : vector<8x8xf32>, vector<8x128xf32>, vector<8x128xf32> -> vector<8x128xf32>
    %91 = arith.addf %89, %90 : vector<8x128xf32>
    %cst_55 = arith.constant 0.000000e+00 : f32
    %92 = vector.broadcast %cst_55 : f32 to vector<8x128xf32>
    %93 = arith.maximumf %91, %92 : vector<8x128xf32>
    %94 = arith.addf %93, %59 : vector<8x128xf32>
    %cst_56 = arith.constant 0.000000e+00 : f32
    %95 = vector.broadcast %cst_56 : f32 to vector<8x128xf32>
    %96 = arith.maximumf %94, %95 : vector<8x128xf32>
    %c0_57 = arith.constant 0 : index
    %c0_58 = arith.constant 0 : index
    %97 = vector.load %arg15[%c0_57, %c0_58] : memref<8x128xf32, #tpu.memory_space<vmem>>, vector<8x128xf32>
    tpu.vector_store %arg15[%c0_57, %c0_58], %96 {strides = array<i32>} : memref<8x128xf32, #tpu.memory_space<vmem>>, vector<8x128xf32>,
    return
  }
}

</mosaic_0001>

<llo_original>
// kernel: _lambda_.1
$region0: #{_lambda_.1}
  #allocation0 [shape = 'u32[]', space=smem, size = 0x4, offset = 0x4, fixed_abs, tag = 'smem constant byte address 0x4 - core index']
  #allocation1 [shape = 'u32[72,128]{1,0:T(1,128)}', space=vmem, size = 0x9000, scoped, tag = 'internal scratch']
  %s0 = inlined_call_operand.vmem [shape: f32[4,128], index: 0, kind: input, shape index: {}]
  %s1 = inlined_call_operand.hbm [shape: f32[8,4], index: 1, kind: input, shape index: {}]
  %s2 = inlined_call_operand.hbm [shape: f32[8,4], index: 2, kind: input, shape index: {}]
  %s3 = inlined_call_operand.hbm [shape: f32[8,1], index: 3, kind: input, shape index: {}]
  %s4 = inlined_call_operand.hbm [shape: f32[8,8], index: 4, kind: input, shape index: {}]
  %s5 = inlined_call_operand.hbm [shape: f32[8,8], index: 5, kind: input, shape index: {}]
  %s6 = inlined_call_operand.hbm [shape: f32[8,1], index: 6, kind: input, shape index: {}]
  %s7 = inlined_call_operand.hbm [shape: f32[8,4], index: 7, kind: input, shape index: {}]
  %s8 = inlined_call_operand.hbm [shape: f32[8,1], index: 8, kind: input, shape index: {}]
  %s9 = inlined_call_operand.hbm [shape: f32[8,8], index: 9, kind: input, shape index: {}]
  %s10 = inlined_call_operand.vmem [shape: f32[8,8], index: 10, kind: input, shape index: {}]
  %s11 = inlined_call_operand.vmem [shape: f32[8,1], index: 11, kind: input, shape index: {}]
  %s12 = inlined_call_operand.vmem [shape: f32[8,8], index: 12, kind: input, shape index: {}]
  %s13 = inlined_call_operand.vmem [shape: f32[8,8], index: 13, kind: input, shape index: {}]
  %s14 = inlined_call_operand.vmem [shape: f32[8,1], index: 14, kind: input, shape index: {}]
  %s15 = inlined_call_operand.vmem [shape: f32[8,128], index: 15, kind: output, shape index: {}]
  %s16 = sld [smem:[#allocation0]]
  $region106: #{_lambda_.1} parent=0
    _
  %s18 = ssub.s32 1, %s16
  %s19 = scalar_select 0, %s18, %s16
  $region1: #{_lambda_.1} parent=0
    #allocation2 [shape = 'u8[4096]{0}', space=vmem, size = 0x1000, scoped, tag = 'input window, operand 1, single buffered']
    #allocation3 [shape = 's32[1]{0}', space=sflag, size = 0x4, scoped, tag = 'scoped memory for _lambda_.1']
    #allocation4 [shape = 'u8[4096]{0}', space=vmem, size = 0x1000, scoped, tag = 'input window, operand 2, single buffered']
    #allocation5 [shape = 's32[1]{0}', space=sflag, size = 0x4, scoped, tag = 'scoped memory for _lambda_.1']
    #allocation6 [shape = 'u8[4096]{0}', space=vmem, size = 0x1000, scoped, tag = 'input window, operand 3, single buffered']
    #allocation7 [shape = 'u8[4096]{0}', space=vmem, size = 0x1000, scoped, tag = 'input window, operand 4, single buffered']
    #allocation8 [shape = 's32[1]{0}', space=sflag, size = 0x4, scoped, tag = 'scoped memory for _lambda_.1']
    #allocation9 [shape = 'u8[4096]{0}', space=vmem, size = 0x1000, scoped, tag = 'input window, operand 5, single buffered']
    #allocation10 [shape = 'u8[4096]{0}', space=vmem, size = 0x1000, scoped, tag = 'input window, operand 6, single buffered']
    #allocation11 [shape = 's32[1]{0}', space=sflag, size = 0x4, scoped, tag = 'scoped memory for _lambda_.1']
    #allocation12 [shape = 'u8[4096]{0}', space=vmem, size = 0x1000, scoped, tag = 'input window, operand 7, single buffered']
    #allocation13 [shape = 'u8[4096]{0}', space=vmem, size = 0x1000, scoped, tag = 'input window, operand 8, single buffered']
    #allocation14 [shape = 's32[1]{0}', space=sflag, size = 0x4, scoped, tag = 'scoped memory for _lambda_.1']
    #allocation15 [shape = 'u8[4096]{0}', space=vmem, size = 0x1000, scoped, tag = 'input window, operand 9, single buffered']
    %20 = vsyncpa [#allocation3], 0
    %21 = vsyncpa [#allocation5], 0
    %22 = vsyncpa [#allocation8], 0
    %23 = vsyncpa [#allocation11], 0
    %24 = vsyncpa [#allocation14], 0
    // Predicated region
    $region2: #{_lambda_.1} parent=1 // pred_check
      _
    $region3: #{_lambda_.1} parent=1 // pred_check_branch
      %26 = sbr.rel (0) target = $region5
    $region4: #{_lambda_.1} parent=1 // pred_region
      _
    $region5: #{_lambda_.1} parent=1 // pred_fallthru
      _
    // Predicated region
    $region6: #{_lambda_.1} parent=1 // pred_check
      _
    $region7: #{_lambda_.1} parent=1 // pred_check_branch
      %28 = sbr.rel (0) target = $region9
    $region8: #{_lambda_.1} parent=1 // pred_region
      %30 = vsyncadd [#allocation3], 0
      %s32 = sshll.u32 %s1, 4
      %s33 = int_to_ptr.hbm [resolvable:$true] %s32
      %s34 = sshll.u32 [#allocation2], 4
      %s35 = int_to_ptr.vmem [resolvable:$true] %s34
      %37 = dma.hbm_to_vmem [thread:$0]  %s33, 128, %s35, [#allocation3]
    $region9: #{_lambda_.1} parent=1 // pred_fallthru
      _
    // Predicated region
    $region10: #{_lambda_.1} parent=1 // pred_check
      _
    $region11: #{_lambda_.1} parent=1 // pred_check_branch
      %39 = sbr.rel (0) target = $region13
    $region12: #{_lambda_.1} parent=1 // pred_region
      %41 = vsyncadd [#allocation5], 0
      %s43 = sshll.u32 %s2, 4
      %s44 = int_to_ptr.hbm [resolvable:$true] %s43
      %s45 = sshll.u32 [#allocation4], 4
      %s46 = int_to_ptr.vmem [resolvable:$true] %s45
      %48 = dma.hbm_to_vmem [thread:$0]  %s44, 128, %s46, [#allocation5]
    $region13: #{_lambda_.1} parent=1 // pred_fallthru
      _
    // Predicated region
    $region14: #{_lambda_.1} parent=1 // pred_check
      _
    $region15: #{_lambda_.1} parent=1 // pred_check_branch
      %50 = sbr.rel (0) target = $region17
    $region16: #{_lambda_.1} parent=1 // pred_region
      %52 = vsyncadd [#allocation5], 0
      %s54 = sshll.u32 %s3, 4
      %s55 = int_to_ptr.hbm [resolvable:$true] %s54
      %s56 = sshll.u32 [#allocation6], 4
      %s57 = int_to_ptr.vmem [resolvable:$true] %s56
      %59 = dma.hbm_to_vmem [thread:$0]  %s55, 128, %s57, [#allocation5]
    $region17: #{_lambda_.1} parent=1 // pred_fallthru
      _
    // Predicated region
    $region18: #{_lambda_.1} parent=1 // pred_check
      _
    $region19: #{_lambda_.1} parent=1 // pred_check_branch
      %61 = sbr.rel (0) target = $region21
    $region20: #{_lambda_.1} parent=1 // pred_region
      %63 = vsyncadd [#allocation8], 0
      %s65 = sshll.u32 %s4, 4
      %s66 = int_to_ptr.hbm [resolvable:$true] %s65
      %s67 = sshll.u32 [#allocation7], 4
      %s68 = int_to_ptr.vmem [resolvable:$true] %s67
      %70 = dma.hbm_to_vmem [thread:$0]  %s66, 128, %s68, [#allocation8]
    $region21: #{_lambda_.1} parent=1 // pred_fallthru
      _
    // Predicated region
    $region22: #{_lambda_.1} parent=1 // pred_check
      _
    $region23: #{_lambda_.1} parent=1 // pred_check_branch
      %72 = sbr.rel (0) target = $region25
    $region24: #{_lambda_.1} parent=1 // pred_region
      %74 = vsyncadd [#allocation8], 0
      %s76 = sshll.u32 %s5, 4
      %s77 = int_to_ptr.hbm [resolvable:$true] %s76
      %s78 = sshll.u32 [#allocation9], 4
      %s79 = int_to_ptr.vmem [resolvable:$true] %s78
      %81 = dma.hbm_to_vmem [thread:$0]  %s77, 128, %s79, [#allocation8]
    $region25: #{_lambda_.1} parent=1 // pred_fallthru
      _
    // Predicated region
    $region26: #{_lambda_.1} parent=1 // pred_check
      _
    $region27: #{_lambda_.1} parent=1 // pred_check_branch
      %83 = sbr.rel (0) target = $region29
    $region28: #{_lambda_.1} parent=1 // pred_region
      %85 = vsyncadd [#allocation11], 0
      %s87 = sshll.u32 %s6, 4
      %s88 = int_to_ptr.hbm [resolvable:$true] %s87
      %s89 = sshll.u32 [#allocation10], 4
      %s90 = int_to_ptr.vmem [resolvable:$true] %s89
      %92 = dma.hbm_to_vmem [thread:$0]  %s88, 128, %s90, [#allocation11]
    $region29: #{_lambda_.1} parent=1 // pred_fallthru
      _
    // Predicated region
    $region30: #{_lambda_.1} parent=1 // pred_check
      _
    $region31: #{_lambda_.1} parent=1 // pred_check_branch
      %94 = sbr.rel (0) target = $region33
    $region32: #{_lambda_.1} parent=1 // pred_region
      %96 = vsyncadd [#allocation11], 0
      %s98 = sshll.u32 %s7, 4
      %s99 = int_to_ptr.hbm [resolvable:$true] %s98
      %s100 = sshll.u32 [#allocation12], 4
      %s101 = int_to_ptr.vmem [resolvable:$true] %s100
      %103 = dma.hbm_to_vmem [thread:$0]  %s99, 128, %s101, [#allocation11]
    $region33: #{_lambda_.1} parent=1 // pred_fallthru
      _
    // Predicated region
    $region34: #{_lambda_.1} parent=1 // pred_check
      _
    $region35: #{_lambda_.1} parent=1 // pred_check_branch
      %105 = sbr.rel (0) target = $region37
    $region36: #{_lambda_.1} parent=1 // pred_region
      %107 = vsyncadd [#allocation14], 0
      %s109 = sshll.u32 %s8, 4
      %s110 = int_to_ptr.hbm [resolvable:$true] %s109
      %s111 = sshll.u32 [#allocation13], 4
      %s112 = int_to_ptr.vmem [resolvable:$true] %s111
      %114 = dma.hbm_to_vmem [thread:$0]  %s110, 128, %s112, [#allocation14]
    $region37: #{_lambda_.1} parent=1 // pred_fallthru
      _
    // Predicated region
    $region38: #{_lambda_.1} parent=1 // pred_check
      _
    $region39: #{_lambda_.1} parent=1 // pred_check_branch
      %116 = sbr.rel (0) target = $region41
    $region40: #{_lambda_.1} parent=1 // pred_region
      %118 = vsyncadd [#allocation14], 0
      %s120 = sshll.u32 %s9, 4
      %s121 = int_to_ptr.hbm [resolvable:$true] %s120
      %s122 = sshll.u32 [#allocation15], 4
      %s123 = int_to_ptr.vmem [resolvable:$true] %s122
      %125 = dma.hbm_to_vmem [thread:$0]  %s121, 128, %s123, [#allocation14]
    $region41: #{_lambda_.1} parent=1 // pred_fallthru
      _
    // Predicated region
    $region42: #{_lambda_.1} parent=1 // pred_check
      _
    $region43: #{_lambda_.1} parent=1 // pred_check_branch
      %127 = sbr.rel (0) target = $region45
    $region44: #{_lambda_.1} parent=1 // pred_region
      _
    $region45: #{_lambda_.1} parent=1 // pred_fallthru
      _
    // Predicated region
    $region46: #{_lambda_.1} parent=1 // pred_check
      _
    $region47: #{_lambda_.1} parent=1 // pred_check_branch
      %129 = sbr.rel (0) target = $region49
    $region48: #{_lambda_.1} parent=1 // pred_region
      _
    $region49: #{_lambda_.1} parent=1 // pred_fallthru
      _
    // Predicated region
    $region50: #{_lambda_.1} parent=1 // pred_check
      _
    $region51: #{_lambda_.1} parent=1 // pred_check_branch
      %131 = sbr.rel (0) target = $region53
    $region52: #{_lambda_.1} parent=1 // pred_region
      _
    $region53: #{_lambda_.1} parent=1 // pred_fallthru
      _
    // Predicated region
    $region54: #{_lambda_.1} parent=1 // pred_check
      _
    $region55: #{_lambda_.1} parent=1 // pred_check_branch
      %133 = sbr.rel (0) target = $region57
    $region56: #{_lambda_.1} parent=1 // pred_region
      _
    $region57: #{_lambda_.1} parent=1 // pred_fallthru
      _
    // Predicated region
    $region58: #{_lambda_.1} parent=1 // pred_check
      _
    $region59: #{_lambda_.1} parent=1 // pred_check_branch
      %135 = sbr.rel (0) target = $region61
    $region60: #{_lambda_.1} parent=1 // pred_region
      _
    $region61: #{_lambda_.1} parent=1 // pred_fallthru
      _
    // Predicated region
    $region62: #{_lambda_.1} parent=1 // pred_check
      _
    $region63: #{_lambda_.1} parent=1 // pred_check_branch
      %137 = sbr.rel (0) target = $region65
    $region64: #{_lambda_.1} parent=1 // pred_region
      %139 = dma.done [#allocation3], 128
    $region65: #{_lambda_.1} parent=1 // pred_fallthru
      _
    // Predicated region
    $region66: #{_lambda_.1} parent=1 // pred_check
      _
    $region67: #{_lambda_.1} parent=1 // pred_check_branch
      %141 = sbr.rel (0) target = $region69
    $region68: #{_lambda_.1} parent=1 // pred_region
      %143 = dma.done [#allocation5], 128
    $region69: #{_lambda_.1} parent=1 // pred_fallthru
      _
    // Predicated region
    $region70: #{_lambda_.1} parent=1 // pred_check
      _
    $region71: #{_lambda_.1} parent=1 // pred_check_branch
      %145 = sbr.rel (0) target = $region73
    $region72: #{_lambda_.1} parent=1 // pred_region
      %147 = dma.done [#allocation5], 128
    $region73: #{_lambda_.1} parent=1 // pred_fallthru
      _
    // Predicated region
    $region74: #{_lambda_.1} parent=1 // pred_check
      _
    $region75: #{_lambda_.1} parent=1 // pred_check_branch
      %149 = sbr.rel (0) target = $region77
    $region76: #{_lambda_.1} parent=1 // pred_region
      %151 = dma.done [#allocation8], 128
    $region77: #{_lambda_.1} parent=1 // pred_fallthru
      _
    // Predicated region
    $region78: #{_lambda_.1} parent=1 // pred_check
      _
    $region79: #{_lambda_.1} parent=1 // pred_check_branch
      %153 = sbr.rel (0) target = $region81
    $region80: #{_lambda_.1} parent=1 // pred_region
      %155 = dma.done [#allocation8], 128
    $region81: #{_lambda_.1} parent=1 // pred_fallthru
      _
    // Predicated region
    $region82: #{_lambda_.1} parent=1 // pred_check
      _
    $region83: #{_lambda_.1} parent=1 // pred_check_branch
      %157 = sbr.rel (0) target = $region85
    $region84: #{_lambda_.1} parent=1 // pred_region
      %159 = dma.done [#allocation11], 128
    $region85: #{_lambda_.1} parent=1 // pred_fallthru
      _
    // Predicated region
    $region86: #{_lambda_.1} parent=1 // pred_check
      _
    $region87: #{_lambda_.1} parent=1 // pred_check_branch
      %161 = sbr.rel (0) target = $region89
    $region88: #{_lambda_.1} parent=1 // pred_region
      %163 = dma.done [#allocation11], 128
    $region89: #{_lambda_.1} parent=1 // pred_fallthru
      _
    // Predicated region
    $region90: #{_lambda_.1} parent=1 // pred_check
      _
    $region91: #{_lambda_.1} parent=1 // pred_check_branch
      %165 = sbr.rel (0) target = $region93
    $region92: #{_lambda_.1} parent=1 // pred_region
      %167 = dma.done [#allocation14], 128
    $region93: #{_lambda_.1} parent=1 // pred_fallthru
      _
    // Predicated region
    $region94: #{_lambda_.1} parent=1 // pred_check
      _
    $region95: #{_lambda_.1} parent=1 // pred_check_branch
      %169 = sbr.rel (0) target = $region97
    $region96: #{_lambda_.1} parent=1 // pred_region
      %171 = dma.done [#allocation14], 128
    $region97: #{_lambda_.1} parent=1 // pred_fallthru
      _
    %v172 = vlaneseq
    %v173 = vand.u32 %v172, 127
    %vm174 = vcmp.lt.s32.totalorder %v173, 0
    %v175 = vsub.s32 0, %v173
    %v176 = vsel %vm174, %v175, %v173
    %v177 = vshrl.u32 %v176, 4
    %v178 = vand.u32 %v176, 15
    %v179 = vsub.s32 0, %v178
    %v180 = vsel %vm174, %v179, %v178
    %vm181 = vcmp.ne.s32.totalorder %v180, 0
    %vm182 = vcmp.lt.s32.totalorder %v180, 0
    %vm183 = vmand %vm182, %vm181
    %v184 = vadd.s32 %v180, 16
    %v185 = vsel %vm183, %v184, %v180
    %v186 = vld [vmem:[%s0] sm:$0xf]
    %v187 = vld [vmem:[#allocation2] sm:$0xff]
    %v188 = vld [vmem:[#allocation4] sm:$0xff]
    %v189 = vld [vmem:[#allocation6] sm:$0xff]
    %v190 = vld [vmem:[#allocation7] sm:$0xff]
    %v191 = vld [vmem:[#allocation9] sm:$0xff]
    %v192 = vld [vmem:[#allocation10] sm:$0xff]
    %v193 = vld [vmem:[#allocation12] sm:$0xff]
    %v194 = vld [vmem:[#allocation13] sm:$0xff]
    %195 = vrot.lane.b32.xlu0 %v186, 1
    %v196 = vpop.permute.xlu0 %195
    %vm197 = vcmp.ge.s32.totalorder %v185, 1
    %v198 = vsel %vm197, 1, 0
    %vm199 = vcmp.eq.s32.totalorder %v198, 1
    %v200 = vsel %vm199, %v196, 0.0
    %vm201 = vcmask 31744
    %v203 = vsel %vm201, %v187, 0
    %vm205 = vcmask 1043456
    %v207 = vsel %vm205, %v200, 0
    %209 = vmatpush.msra.mxu0 0.0
    %210 = vmatpush.msra.mxu0 0.0
    %211 = vmatpush.msra.mxu0 0.0
    %212 = vmatpush.msra.mxu0 0.0
    %213 = vmatpush.msra.mxu0 0.0
    %214 = vmatpush.msra.mxu0 0.0
    %215 = vmatpush.msra.mxu0 0.0
    %216 = vmatpush.msra.mxu0 0.0
    %217 = vmatpush.msra.mxu0 0.0
    %218 = vmatpush.msra.mxu0 0.0
    %219 = vmatpush.msra.mxu0 0.0
    %220 = vmatpush.msra.mxu0 0.0
    %221 = vmatpush.msra.mxu0 0.0
    %222 = vmatpush.msra.mxu0 0.0
    %223 = vmatpush.msra.mxu0 0.0
    %224 = vmatpush.msra.mxu0 %v207
    %225 = vmatmul.f32.gmra.mxu0 %v203
    %v226 = vpop.f32.mrf.mxu0
    %v227 = vadd.f32 0.0, %v226
    %228 = vdwg.mxu0
    %230 = vset.pattern.permute.xlu0 0
    %231 = vperm.xlu0 %230, %v189
    %v232 = vpop.permute.xlu0 %231
    %v234 = vadd.f32 %v232, %v227
    %v236 = vsel %vm201, %v188, 0
    %v239 = vsel %vm205, %v186, 0
    %241 = vmatpush.msra.mxu0 0.0
    %242 = vmatpush.msra.mxu0 0.0
    %243 = vmatpush.msra.mxu0 0.0
    %244 = vmatpush.msra.mxu0 0.0
    %245 = vmatpush.msra.mxu0 0.0
    %246 = vmatpush.msra.mxu0 0.0
    %247 = vmatpush.msra.mxu0 0.0
    %248 = vmatpush.msra.mxu0 0.0
    %249 = vmatpush.msra.mxu0 0.0
    %250 = vmatpush.msra.mxu0 0.0
    %251 = vmatpush.msra.mxu0 0.0
    %252 = vmatpush.msra.mxu0 0.0
    %253 = vmatpush.msra.mxu0 0.0
    %254 = vmatpush.msra.mxu0 0.0
    %255 = vmatpush.msra.mxu0 0.0
    %256 = vmatpush.msra.mxu0 %v239
    %257 = vmatmul.f32.gmra.mxu0 %v236
    %v258 = vpop.f32.mrf.mxu0
    %v259 = vadd.f32 0.0, %v258
    %260 = vdwg.mxu0
    %v261 = vadd.f32 %v234, %v259
    %v262 = vmax.f32 %v261, 0.0
    %263 = vrot.lane.b32.xlu0 %v262, 1
    %v264 = vpop.permute.xlu0 %263
    %v265 = vsel %vm199, %v264, 0.0
    %vm266 = vcmask 64512
    %v268 = vsel %vm266, %v190, 0
    %270 = vmatpush.msra.mxu0 0.0
    %271 = vmatpush.msra.mxu0 0.0
    %272 = vmatpush.msra.mxu0 0.0
    %273 = vmatpush.msra.mxu0 0.0
    %274 = vmatpush.msra.mxu0 0.0
    %275 = vmatpush.msra.mxu0 0.0
    %276 = vmatpush.msra.mxu0 0.0
    %277 = vmatpush.msra.mxu0 0.0
    %278 = vmatpush.msra.mxu0 0.0
    %279 = vmatpush.msra.mxu0 0.0
    %280 = vmatpush.msra.mxu0 0.0
    %281 = vmatpush.msra.mxu0 0.0
    %282 = vmatpush.msra.mxu0 0.0
    %283 = vmatpush.msra.mxu0 0.0
    %284 = vmatpush.msra.mxu0 0.0
    %285 = vmatpush.msra.mxu0 %v265
    %286 = vmatmul.f32.gmra.mxu0 %v268
    %v287 = vpop.f32.mrf.mxu0
    %v288 = vadd.f32 0.0, %v287
    %289 = vdwg.mxu0
    %291 = vset.pattern.permute.xlu0 0
    %292 = vperm.xlu0 %291, %v192
    %v293 = vpop.permute.xlu0 %292
    %v295 = vadd.f32 %v293, %v288
    %v297 = vsel %vm266, %v191, 0
    %299 = vmatpush.msra.mxu0 0.0
    %300 = vmatpush.msra.mxu0 0.0
    %301 = vmatpush.msra.mxu0 0.0
    %302 = vmatpush.msra.mxu0 0.0
    %303 = vmatpush.msra.mxu0 0.0
    %304 = vmatpush.msra.mxu0 0.0
    %305 = vmatpush.msra.mxu0 0.0
    %306 = vmatpush.msra.mxu0 0.0
    %307 = vmatpush.msra.mxu0 0.0
    %308 = vmatpush.msra.mxu0 0.0
    %309 = vmatpush.msra.mxu0 0.0
    %310 = vmatpush.msra.mxu0 0.0
    %311 = vmatpush.msra.mxu0 0.0
    %312 = vmatpush.msra.mxu0 0.0
    %313 = vmatpush.msra.mxu0 0.0
    %314 = vmatpush.msra.mxu0 %v262
    %315 = vmatmul.f32.gmra.mxu0 %v297
    %v316 = vpop.f32.mrf.mxu0
    %v317 = vadd.f32 0.0, %v316
    %318 = vdwg.mxu0
    %v319 = vadd.f32 %v295, %v317
    %v320 = vmax.f32 %v319, 0.0
    %322 = vset.pattern.permute.xlu0 0
    %323 = vperm.xlu0 %322, %v194
    %v324 = vpop.permute.xlu0 %323
    %v327 = vsel %vm201, %v193, 0
    %329 = vmatpush.msra.mxu0 0.0
    %330 = vmatpush.msra.mxu0 0.0
    %331 = vmatpush.msra.mxu0 0.0
    %332 = vmatpush.msra.mxu0 0.0
    %333 = vmatpush.msra.mxu0 0.0
    %334 = vmatpush.msra.mxu0 0.0
    %335 = vmatpush.msra.mxu0 0.0
    %336 = vmatpush.msra.mxu0 0.0
    %337 = vmatpush.msra.mxu0 0.0
    %338 = vmatpush.msra.mxu0 0.0
    %339 = vmatpush.msra.mxu0 0.0
    %340 = vmatpush.msra.mxu0 0.0
    %341 = vmatpush.msra.mxu0 0.0
    %342 = vmatpush.msra.mxu0 0.0
    %343 = vmatpush.msra.mxu0 0.0
    %344 = vmatpush.msra.mxu0 %v239
    %345 = vmatmul.f32.gmra.mxu0 %v327
    %v346 = vpop.f32.mrf.mxu0
    %v347 = vadd.f32 %v324, %v346
    %348 = vdwg.mxu0
    %v349 = vadd.f32 %v320, %v347
    %v350 = vmax.f32 %v349, 0.0
    %v351 = vld [vmem:[#allocation15] sm:$0xff]
    %v352 = vld [vmem:[%s10] sm:$0xff]
    %v353 = vld [vmem:[%s11] sm:$0xff]
    %v354 = vld [vmem:[%s12] sm:$0xff]
    %v355 = vld [vmem:[%s13] sm:$0xff]
    %v356 = vld [vmem:[%s14] sm:$0xff]
    %357 = vrot.lane.b32.xlu0 %v350, 2
    %v358 = vpop.permute.xlu0 %357
    %vm359 = vcmp.ge.s32.totalorder %v185, 2
    %v360 = vsel %vm359, 1, 0
    %vm361 = vcmp.eq.s32.totalorder %v360, 1
    %v362 = vsel %vm361, %v358, 0.0
    %v364 = vsel %vm266, %v351, 0
    %366 = vmatpush.msra.mxu0 0.0
    %367 = vmatpush.msra.mxu0 0.0
    %368 = vmatpush.msra.mxu0 0.0
    %369 = vmatpush.msra.mxu0 0.0
    %370 = vmatpush.msra.mxu0 0.0
    %371 = vmatpush.msra.mxu0 0.0
    %372 = vmatpush.msra.mxu0 0.0
    %373 = vmatpush.msra.mxu0 0.0
    %374 = vmatpush.msra.mxu0 0.0
    %375 = vmatpush.msra.mxu0 0.0
    %376 = vmatpush.msra.mxu0 0.0
    %377 = vmatpush.msra.mxu0 0.0
    %378 = vmatpush.msra.mxu0 0.0
    %379 = vmatpush.msra.mxu0 0.0
    %380 = vmatpush.msra.mxu0 0.0
    %381 = vmatpush.msra.mxu0 %v362
    %382 = vmatmul.f32.gmra.mxu0 %v364
    %v383 = vpop.f32.mrf.mxu0
    %v384 = vadd.f32 0.0, %v383
    %385 = vdwg.mxu0
    %387 = vset.pattern.permute.xlu0 0
    %388 = vperm.xlu0 %387, %v353
    %v389 = vpop.permute.xlu0 %388
    %v391 = vadd.f32 %v389, %v384
    %v393 = vsel %vm266, %v352, 0
    %395 = vmatpush.msra.mxu0 0.0
    %396 = vmatpush.msra.mxu0 0.0
    %397 = vmatpush.msra.mxu0 0.0
    %398 = vmatpush.msra.mxu0 0.0
    %399 = vmatpush.msra.mxu0 0.0
    %400 = vmatpush.msra.mxu0 0.0
    %401 = vmatpush.msra.mxu0 0.0
    %402 = vmatpush.msra.mxu0 0.0
    %403 = vmatpush.msra.mxu0 0.0
    %404 = vmatpush.msra.mxu0 0.0
    %405 = vmatpush.msra.mxu0 0.0
    %406 = vmatpush.msra.mxu0 0.0
    %407 = vmatpush.msra.mxu0 0.0
    %408 = vmatpush.msra.mxu0 0.0
    %409 = vmatpush.msra.mxu0 0.0
    %410 = vmatpush.msra.mxu0 %v350
    %411 = vmatmul.f32.gmra.mxu0 %v393
    %v412 = vpop.f32.mrf.mxu0
    %v413 = vadd.f32 0.0, %v412
    %414 = vdwg.mxu0
    %v415 = vadd.f32 %v391, %v413
    %v416 = vmax.f32 %v415, 0.0
    %417 = vrot.lane.b32.xlu0 %v416, 2
    %v418 = vpop.permute.xlu0 %417
    %v419 = vsel %vm361, %v418, 0.0
    %v421 = vsel %vm266, %v354, 0
    %423 = vmatpush.msra.mxu0 0.0
    %424 = vmatpush.msra.mxu0 0.0
    %425 = vmatpush.msra.mxu0 0.0
    %426 = vmatpush.msra.mxu0 0.0
    %427 = vmatpush.msra.mxu0 0.0
    %428 = vmatpush.msra.mxu0 0.0
    %429 = vmatpush.msra.mxu0 0.0
    %430 = vmatpush.msra.mxu0 0.0
    %431 = vmatpush.msra.mxu0 0.0
    %432 = vmatpush.msra.mxu0 0.0
    %433 = vmatpush.msra.mxu0 0.0
    %434 = vmatpush.msra.mxu0 0.0
    %435 = vmatpush.msra.mxu0 0.0
    %436 = vmatpush.msra.mxu0 0.0
    %437 = vmatpush.msra.mxu0 0.0
    %438 = vmatpush.msra.mxu0 %v419
    %439 = vmatmul.f32.gmra.mxu0 %v421
    %v440 = vpop.f32.mrf.mxu0
    %v441 = vadd.f32 0.0, %v440
    %442 = vdwg.mxu0
    %444 = vset.pattern.permute.xlu0 0
    %445 = vperm.xlu0 %444, %v356
    %v446 = vpop.permute.xlu0 %445
    %v448 = vadd.f32 %v446, %v441
    %v450 = vsel %vm266, %v355, 0
    %452 = vmatpush.msra.mxu0 0.0
    %453 = vmatpush.msra.mxu0 0.0
    %454 = vmatpush.msra.mxu0 0.0
    %455 = vmatpush.msra.mxu0 0.0
    %456 = vmatpush.msra.mxu0 0.0
    %457 = vmatpush.msra.mxu0 0.0
    %458 = vmatpush.msra.mxu0 0.0
    %459 = vmatpush.msra.mxu0 0.0
    %460 = vmatpush.msra.mxu0 0.0
    %461 = vmatpush.msra.mxu0 0.0
    %462 = vmatpush.msra.mxu0 0.0
    %463 = vmatpush.msra.mxu0 0.0
    %464 = vmatpush.msra.mxu0 0.0
    %465 = vmatpush.msra.mxu0 0.0
    %466 = vmatpush.msra.mxu0 0.0
    %467 = vmatpush.msra.mxu0 %v416
    %468 = vmatmul.f32.gmra.mxu0 %v450
    %v469 = vpop.f32.mrf.mxu0
    %v470 = vadd.f32 0.0, %v469
    %471 = vdwg.mxu0
    %v472 = vadd.f32 %v448, %v470
    %v473 = vmax.f32 %v472, 0.0
    %v474 = vadd.f32 %v473, %v350
    %v475 = vmax.f32 %v474, 0.0
    %476 = vst [vmem:[%s15] sm:$0xff] %v475
    // Predicated region
    $region98: #{_lambda_.1} parent=1 // pred_check
      _
    $region99: #{_lambda_.1} parent=1 // pred_check_branch
      %478 = sbr.rel (0) target = $region101
    $region100: #{_lambda_.1} parent=1 // pred_region
      _
    $region101: #{_lambda_.1} parent=1 // pred_fallthru
      _
    // Predicated region
    $region102: #{_lambda_.1} parent=1 // pred_check
      _
    $region103: #{_lambda_.1} parent=1 // pred_check_branch
      %480 = sbr.rel (0) target = $region105
    $region104: #{_lambda_.1} parent=1 // pred_region
      _
    $region105: #{_lambda_.1} parent=1 // pred_fallthru
      _
    %481 = vsyncpa [#allocation3], 1
    %482 = vsyncpa [#allocation5], 1
    %483 = vsyncpa [#allocation8], 1
    %484 = vsyncpa [#allocation11], 1
    %485 = vsyncpa [#allocation14], 1

</llo_original>
